<compile_context>
chip_gen: v7x
topology: tpu7x:2x2x1
jax: 0.10.0
libtpu: 0.0.40
codegen_flags: <defaults>
</compile_context>

<pallas_src>
import jax
import jax.numpy as jnp
from jax.experimental import pallas as pl
from jax.experimental.pallas import tpu as pltpu


def _round_up(n, m):
    return ((n + m - 1) // m) * m


def generator_kernel(x_ref, w1_ref, b1_ref, w2_ref, b2_ref, w3_ref, b3_ref, o_ref):
    # Layer 1: bf16 matmul on MXU with f32 accumulation; bias add + tanh in f32
    # (VPU/EUP), so v5e (no bf16 VPU/EUP) takes no conversion penalty.
    h1 = jnp.tanh(
        jnp.dot(x_ref[...], w1_ref[...], preferred_element_type=jnp.float32)
        + b1_ref[...]
    )
    # Layer 2: downcast activation only at the MXU input.
    h2 = jnp.tanh(
        jnp.dot(h1.astype(w2_ref.dtype), w2_ref[...],
                preferred_element_type=jnp.float32)
        + b2_ref[...]
    )
    # Layer 3: Linear, no activation. Output stays f32, lane-dense (128-wide).
    out = (
        jnp.dot(h2.astype(w3_ref.dtype), w3_ref[...],
                preferred_element_type=jnp.float32)
        + b3_ref[...]
    )
    o_ref[...] = out.astype(o_ref.dtype)


def generator_forward(x, w1, b1, w2, b2, w3, b3, *, batch_tile=512,
                      compute_dtype=jnp.bfloat16):
    """x: (B, input_size) -> (B, output_size), matching nn.Sequential forward.

    Weights are (in_features, out_features); y = x @ W + b is equivalent to
    PyTorch's x @ W.T + b with W of shape (out, in).
    """
    B, in_size = x.shape
    hidden = w1.shape[1]
    out_size = w3.shape[1]

    # Lane-dense feature padding (multiples of 128 on the lane axis).
    h_pad = _round_up(hidden, 128)
    o_pad = _round_up(out_size, 128)

    # Batch tile: multiple of 8 sublanes; large tiles amortize per-step overhead.
    # Per-row VMEM cost is ~1 KiB even padded, so TB=512 double-buffered is well
    # inside the v7x 64 MiB (32 MiB scoped) budget.
    tb = min(batch_tile, _round_up(B, 8))
    b_pad = _round_up(B, tb)

    def pad2(a, rows, cols):
        return jnp.pad(a, ((0, rows - a.shape[0]), (0, cols - a.shape[1])))

    b1 = b1.reshape(1, -1)
    b2 = b2.reshape(1, -1)
    b3 = b3.reshape(1, -1)

    # bf16 matmul operands; biases kept f32 (added to the f32 accumulator).
    x_p = pad2(x, b_pad, in_size).astype(compute_dtype)
    w1_p = pad2(w1, in_size, h_pad).astype(compute_dtype)
    w2_p = pad2(w2, h_pad, h_pad).astype(compute_dtype)
    w3_p = pad2(w3, h_pad, o_pad).astype(compute_dtype)
    b1_p = pad2(b1, 1, h_pad).astype(jnp.float32)
    b2_p = pad2(b2, 1, h_pad).astype(jnp.float32)
    b3_p = pad2(b3, 1, o_pad).astype(jnp.float32)

    grid = (b_pad // tb,)

    def resident(shape):
        # Same block index every step -> stays VMEM-resident across the grid.
        return pl.BlockSpec(shape, lambda i: (0, 0))

    flops = 2 * b_pad * (in_size * h_pad + h_pad * h_pad + h_pad * o_pad)
    bytes_accessed = (
        x_p.size * x_p.dtype.itemsize
        + b_pad * o_pad * 4
        + sum(int(a.size) * a.dtype.itemsize
              for a in (w1_p, w2_p, w3_p, b1_p, b2_p, b3_p))
    )
    cost = pl.CostEstimate(
        flops=flops,
        transcendentals=2 * b_pad * h_pad,
        bytes_accessed=bytes_accessed,
    )

    out_p = pl.pallas_call(
        generator_kernel,
        out_shape=jax.ShapeDtypeStruct((b_pad, o_pad), jnp.float32),
        grid=grid,
        in_specs=[
            pl.BlockSpec((tb, in_size), lambda i: (i, 0)),   # x: tiled over batch
            resident((in_size, h_pad)),                      # w1
            resident((1, h_pad)),                            # b1
            resident((h_pad, h_pad)),                        # w2
            resident((1, h_pad)),                            # b2
            resident((h_pad, o_pad)),                        # w3
            resident((1, o_pad)),                            # b3
        ],
        out_specs=pl.BlockSpec((tb, o_pad), lambda i: (i, 0)),
        compiler_params=pltpu.CompilerParams(
            dimension_semantics=("parallel",)),
        cost_estimate=cost,
    )(x_p, w1_p, b1_p, w2_p, b2_p, w3_p, b3_p)

    # Strip batch / feature padding outside the kernel.
    return out_p[:B, :out_size]


def init_params(key, input_size, hidden_size, output_size):
    """Deterministic synthetic parameters (PyTorch-Linear-like uniform init)."""
    ks = jax.random.split(key, 6)

    def lin(kw, kb, fan_in, fan_out):
        bound = 1.0 / jnp.sqrt(fan_in)
        w = jax.random.uniform(kw, (fan_in, fan_out), jnp.float32, -bound, bound)
        b = jax.random.uniform(kb, (1, fan_out), jnp.float32, -bound, bound)
        return w, b

    w1, b1 = lin(ks[0], ks[1], input_size, hidden_size)
    w2, b2 = lin(ks[2], ks[3], hidden_size, hidden_size)
    w3, b3 = lin(ks[4], ks[5], hidden_size, output_size)
    return w1, b1, w2, b2, w3, b3


if __name__ == "__main__":
    input_size, hidden_size, output_size = 8, 32, 16
    batch = 2

    key = jax.random.PRNGKey(0)
    kx, kp = jax.random.split(key)

    x = jax.random.normal(kx, (batch, input_size), jnp.float32)
    params = init_params(kp, input_size, hidden_size, output_size)

    out = generator_forward(x, *params)
    out = jax.block_until_ready(out)

    # Pure-JAX reference emulating the kernel's bf16 matmul inputs with
    # f32 accumulation / bias / tanh.
    w1, b1, w2, b2, w3, b3 = params
    bf = lambda a: a.astype(jnp.bfloat16).astype(jnp.float32)
    h1 = jnp.tanh(bf(x) @ bf(w1) + b1.reshape(1, -1))
    h2 = jnp.tanh(bf(h1) @ bf(w2) + b2.reshape(1, -1))
    ref = bf(h2) @ bf(w3) + b3.reshape(1, -1)

    assert out.shape == (batch, output_size)
    assert jnp.allclose(out, ref, atol=1e-2, rtol=1e-2)

    print("KERNEL_OK")
</pallas_src>

<mosaic_0001>
module attributes {stable_mosaic.version = 11 : i64} {
  func.func @generator_kernel(%arg0: i32, %arg1: memref<8x8xbf16, #tpu.memory_space<vmem>>, %arg2: memref<8x128xbf16, #tpu.memory_space<vmem>>, %arg3: memref<1x128xf32, #tpu.memory_space<vmem>>, %arg4: memref<128x128xbf16, #tpu.memory_space<vmem>>, %arg5: memref<1x128xf32, #tpu.memory_space<vmem>>, %arg6: memref<128x128xbf16, #tpu.memory_space<vmem>>, %arg7: memref<1x128xf32, #tpu.memory_space<vmem>>, %arg8: memref<8x128xf32, #tpu.memory_space<vmem>>) attributes {dimension_semantics = [#tpu.dimension_semantics<parallel>], iteration_bounds = array<i64: 1>, scalar_prefetch = 0 : i64, scratch_operands = 0 : i64, tpu.core_type = #tpu.core_type<tc>, window_params = [{transform_indices = @transform_0, window_bounds = array<i64: 8, 8>}, {pipeline_mode = #tpu.pipeline_mode<synchronous>, transform_indices = @transform_1, window_bounds = array<i64: 8, 128>}, {pipeline_mode = #tpu.pipeline_mode<synchronous>, transform_indices = @transform_2, window_bounds = array<i64: 1, 128>}, {pipeline_mode = #tpu.pipeline_mode<synchronous>, transform_indices = @transform_3, window_bounds = array<i64: 128, 128>}, {pipeline_mode = #tpu.pipeline_mode<synchronous>, transform_indices = @transform_4, window_bounds = array<i64: 1, 128>}, {pipeline_mode = #tpu.pipeline_mode<synchronous>, transform_indices = @transform_5, window_bounds = array<i64: 128, 128>}, {pipeline_mode = #tpu.pipeline_mode<synchronous>, transform_indices = @transform_6, window_bounds = array<i64: 1, 128>}, {transform_indices = @transform_7, window_bounds = array<i64: 8, 128>}]} {
    %c0 = arith.constant 0 : index
    %c0_0 = arith.constant 0 : index
    %0 = vector.load %arg1[%c0, %c0_0] : memref<8x8xbf16, #tpu.memory_space<vmem>>, vector<8x8xbf16>
    %c0_1 = arith.constant 0 : index
    %c0_2 = arith.constant 0 : index
    %1 = vector.load %arg2[%c0_1, %c0_2] : memref<8x128xbf16, #tpu.memory_space<vmem>>, vector<8x128xbf16>
    %cst = arith.constant dense<0.000000e+00> : vector<8x128xf32>
    %2 = tpu.matmul %0, %1, %cst {dimension_numbers = #tpu.dot_dimension_numbers<[1], [0], [0], [1], [0, 0, 1, 1], [], []>} : vector<8x8xbf16>, vector<8x128xbf16>, vector<8x128xf32> -> vector<8x128xf32>
    %c0_3 = arith.constant 0 : index
    %c0_4 = arith.constant 0 : index
    %3 = vector.load %arg3[%c0_3, %c0_4] : memref<1x128xf32, #tpu.memory_space<vmem>>, vector<1x128xf32>
    %4 = vector.broadcast %3 : vector<1x128xf32> to vector<8x128xf32>
    %5 = arith.addf %2, %4 : vector<8x128xf32>
    %6 = math.tanh %5 : vector<8x128xf32>
    %7 = arith.truncf %6 : vector<8x128xf32> to vector<8x128xbf16>
    %c0_5 = arith.constant 0 : index
    %c0_6 = arith.constant 0 : index
    %8 = vector.load %arg4[%c0_5, %c0_6] : memref<128x128xbf16, #tpu.memory_space<vmem>>, vector<128x128xbf16>
    %cst_7 = arith.constant dense<0.000000e+00> : vector<8x128xf32>
    %9 = tpu.matmul %7, %8, %cst_7 {dimension_numbers = #tpu.dot_dimension_numbers<[1], [0], [0], [1], [0, 0, 1, 1], [], []>} : vector<8x128xbf16>, vector<128x128xbf16>, vector<8x128xf32> -> vector<8x128xf32>
    %c0_8 = arith.constant 0 : index
    %c0_9 = arith.constant 0 : index
    %10 = vector.load %arg5[%c0_8, %c0_9] : memref<1x128xf32, #tpu.memory_space<vmem>>, vector<1x128xf32>
    %11 = vector.broadcast %10 : vector<1x128xf32> to vector<8x128xf32>
    %12 = arith.addf %9, %11 : vector<8x128xf32>
    %13 = math.tanh %12 : vector<8x128xf32>
    %14 = arith.truncf %13 : vector<8x128xf32> to vector<8x128xbf16>
    %c0_10 = arith.constant 0 : index
    %c0_11 = arith.constant 0 : index
    %15 = vector.load %arg6[%c0_10, %c0_11] : memref<128x128xbf16, #tpu.memory_space<vmem>>, vector<128x128xbf16>
    %cst_12 = arith.constant dense<0.000000e+00> : vector<8x128xf32>
    %16 = tpu.matmul %14, %15, %cst_12 {dimension_numbers = #tpu.dot_dimension_numbers<[1], [0], [0], [1], [0, 0, 1, 1], [], []>} : vector<8x128xbf16>, vector<128x128xbf16>, vector<8x128xf32> -> vector<8x128xf32>
    %c0_13 = arith.constant 0 : index
    %c0_14 = arith.constant 0 : index
    %17 = vector.load %arg7[%c0_13, %c0_14] : memref<1x128xf32, #tpu.memory_space<vmem>>, vector<1x128xf32>
    %18 = vector.broadcast %17 : vector<1x128xf32> to vector<8x128xf32>
    %19 = arith.addf %16, %18 : vector<8x128xf32>
    %c0_15 = arith.constant 0 : index
    %c0_16 = arith.constant 0 : index
    %20 = vector.load %arg8[%c0_15, %c0_16] : memref<8x128xf32, #tpu.memory_space<vmem>>, vector<8x128xf32>
    tpu.vector_store %arg8[%c0_15, %c0_16], %19 {strides = array<i32>} : memref<8x128xf32, #tpu.memory_space<vmem>>, vector<8x128xf32>,
    return
  }
  func.func @transform_0(%arg0: i32) -> (i32, i32) {
    %c0_i32 = arith.constant 0 : i32
    %c0_i32_0 = arith.constant 0 : i32
    return %arg0, %c0_i32 : i32, i32
  }
  func.func @transform_1(%arg0: i32) -> (i32, i32) {
    %c0_i32 = arith.constant 0 : i32
    %c0_i32_0 = arith.constant 0 : i32
    %c0_i32_1 = arith.constant 0 : i32
    return %c0_i32, %c0_i32_0 : i32, i32
  }
  func.func @transform_2(%arg0: i32) -> (i32, i32) {
    %c0_i32 = arith.constant 0 : i32
    %c0_i32_0 = arith.constant 0 : i32
    %c0_i32_1 = arith.constant 0 : i32
    return %c0_i32, %c0_i32_0 : i32, i32
  }
  func.func @transform_3(%arg0: i32) -> (i32, i32) {
    %c0_i32 = arith.constant 0 : i32
    %c0_i32_0 = arith.constant 0 : i32
    %c0_i32_1 = arith.constant 0 : i32
    return %c0_i32, %c0_i32_0 : i32, i32
  }
  func.func @transform_4(%arg0: i32) -> (i32, i32) {
    %c0_i32 = arith.constant 0 : i32
    %c0_i32_0 = arith.constant 0 : i32
    %c0_i32_1 = arith.constant 0 : i32
    return %c0_i32, %c0_i32_0 : i32, i32
  }
  func.func @transform_5(%arg0: i32) -> (i32, i32) {
    %c0_i32 = arith.constant 0 : i32
    %c0_i32_0 = arith.constant 0 : i32
    %c0_i32_1 = arith.constant 0 : i32
    return %c0_i32, %c0_i32_0 : i32, i32
  }
  func.func @transform_6(%arg0: i32) -> (i32, i32) {
    %c0_i32 = arith.constant 0 : i32
    %c0_i32_0 = arith.constant 0 : i32
    %c0_i32_1 = arith.constant 0 : i32
    return %c0_i32, %c0_i32_0 : i32, i32
  }
  func.func @transform_7(%arg0: i32) -> (i32, i32) {
    %c0_i32 = arith.constant 0 : i32
    %c0_i32_0 = arith.constant 0 : i32
    return %arg0, %c0_i32 : i32, i32
  }
}

</mosaic_0001>

<llo_original>
// kernel: tpu_custom_call.1
$region0: #{tpu_custom_call.1}
  #allocation0 [shape = 'u32[]', space=smem, size = 0x4, offset = 0x4, fixed_abs, tag = 'smem constant byte address 0x4 - core index']
  #allocation1 [shape = 'u32[144,128]{1,0:T(1,128)}', space=vmem, size = 0x12000, scoped, tag = 'internal scratch']
  %s0 = inlined_call_operand.hbm [shape: bf16[8,8], index: 0, kind: input, shape index: {}]
  %s1 = inlined_call_operand.hbm [shape: bf16[8,128], index: 1, kind: input, shape index: {}]
  %s2 = inlined_call_operand.vmem [shape: f32[1,128], index: 2, kind: input, shape index: {}]
  %s3 = inlined_call_operand.hbm [shape: bf16[128,128], index: 3, kind: input, shape index: {}]
  %s4 = inlined_call_operand.vmem [shape: f32[1,128], index: 4, kind: input, shape index: {}]
  %s5 = inlined_call_operand.hbm [shape: bf16[128,128], index: 5, kind: input, shape index: {}]
  %s6 = inlined_call_operand.vmem [shape: f32[1,128], index: 6, kind: input, shape index: {}]
  %s7 = inlined_call_operand.hbm [shape: f32[8,128], index: 7, kind: output, shape index: {}]
  %s8 = sld [smem:[#allocation0]]
  $region54: #{tpu_custom_call.1} parent=0
    _
  %s10 = ssub.s32 1, %s8
  %s11 = scalar_select 0, %s10, %s8
  $region1: #{tpu_custom_call.1} parent=0
    #allocation2 [shape = 'u8[2048]{0}', space=vmem, size = 0x800, scoped, tag = 'input window, operand 0, single buffered']
    #allocation3 [shape = 's32[1]{0}', space=sflag, size = 0x4, scoped, tag = 'scoped memory for tpu_custom_call.1']
    #allocation4 [shape = 's32[1]{0}', space=sflag, size = 0x4, scoped, tag = 'scoped memory for tpu_custom_call.1']
    #allocation5 [shape = 'u8[2048]{0}', space=vmem, size = 0x800, scoped, tag = 'input window, operand 1, single buffered']
    #allocation6 [shape = 's32[1]{0}', space=sflag, size = 0x4, scoped, tag = 'scoped memory for tpu_custom_call.1']
    #allocation7 [shape = 'u8[32768]{0}', space=vmem, size = 0x8000, scoped, tag = 'input window, operand 3, single buffered']
    #allocation8 [shape = 'u8[32768]{0}', space=vmem, size = 0x8000, scoped, tag = 'input window, operand 5, single buffered']
    #allocation9 [shape = 's32[1]{0}', space=sflag, size = 0x4, scoped, tag = 'scoped memory for tpu_custom_call.1']
    #allocation10 [shape = 'u8[4096]{0}', space=vmem, size = 0x1000, scoped, tag = 'output window, operand 0, single buffered']
    %12 = vsyncpa [#allocation3], 0
    %13 = vsyncpa [#allocation6], 0
    %14 = vsyncpa [#allocation9], 0
    %15 = vsyncpa [#allocation4], 0
    // Predicated region
    $region2: #{tpu_custom_call.1} parent=1 // pred_check
      _
    $region3: #{tpu_custom_call.1} parent=1 // pred_check_branch
      %17 = sbr.rel (0) target = $region5
    $region4: #{tpu_custom_call.1} parent=1 // pred_region
      %s19 = ssub.s32 64, 64
      %20 = vsyncadd [#allocation3], %s19
      %s22 = sshll.u32 [#allocation2], 4
      %s23 = int_to_ptr.vmem [resolvable:$true] %s22
      %25 = dma.hbm_to_vmem [thread:$0]  %s0, 64, %s23, [#allocation3]
    $region5: #{tpu_custom_call.1} parent=1 // pred_fallthru
      _
    // Predicated region
    $region6: #{tpu_custom_call.1} parent=1 // pred_check
      _
    $region7: #{tpu_custom_call.1} parent=1 // pred_check_branch
      %27 = sbr.rel (0) target = $region9
    $region8: #{tpu_custom_call.1} parent=1 // pred_region
      %s29 = ssub.s32 64, 64
      %30 = vsyncadd [#allocation6], %s29
      %s32 = sshll.u32 [#allocation5], 4
      %s33 = int_to_ptr.vmem [resolvable:$true] %s32
      %35 = dma.hbm_to_vmem [thread:$0]  %s1, 64, %s33, [#allocation6]
    $region9: #{tpu_custom_call.1} parent=1 // pred_fallthru
      _
    // Predicated region
    $region10: #{tpu_custom_call.1} parent=1 // pred_check
      _
    $region11: #{tpu_custom_call.1} parent=1 // pred_check_branch
      %37 = sbr.rel (0) target = $region13
    $region12: #{tpu_custom_call.1} parent=1 // pred_region
      _
    $region13: #{tpu_custom_call.1} parent=1 // pred_fallthru
      _
    // Predicated region
    $region14: #{tpu_custom_call.1} parent=1 // pred_check
      _
    $region15: #{tpu_custom_call.1} parent=1 // pred_check_branch
      %39 = sbr.rel (0) target = $region17
    $region16: #{tpu_custom_call.1} parent=1 // pred_region
      %s41 = ssub.s32 1024, 1024
      %42 = vsyncadd [#allocation6], %s41
      %s43 = sshll.u32 [#allocation7], 4
      %s44 = int_to_ptr.vmem [resolvable:$true] %s43
      %49 = dma.hbm_to_vmem [thread:$0]  %s3, 1024, %s44, [#allocation6], 64, 64, 4
    $region17: #{tpu_custom_call.1} parent=1 // pred_fallthru
      _
    // Predicated region
    $region18: #{tpu_custom_call.1} parent=1 // pred_check
      _
    $region19: #{tpu_custom_call.1} parent=1 // pred_check_branch
      %51 = sbr.rel (0) target = $region21
    $region20: #{tpu_custom_call.1} parent=1 // pred_region
      _
    $region21: #{tpu_custom_call.1} parent=1 // pred_fallthru
      _
    // Predicated region
    $region22: #{tpu_custom_call.1} parent=1 // pred_check
      _
    $region23: #{tpu_custom_call.1} parent=1 // pred_check_branch
      %53 = sbr.rel (0) target = $region25
    $region24: #{tpu_custom_call.1} parent=1 // pred_region
      %s55 = ssub.s32 1024, 1024
      %56 = vsyncadd [#allocation9], %s55
      %s57 = sshll.u32 [#allocation8], 4
      %s58 = int_to_ptr.vmem [resolvable:$true] %s57
      %63 = dma.hbm_to_vmem [thread:$0]  %s5, 1024, %s58, [#allocation9], 64, 64, 4
    $region25: #{tpu_custom_call.1} parent=1 // pred_fallthru
      _
    // Predicated region
    $region26: #{tpu_custom_call.1} parent=1 // pred_check
      _
    $region27: #{tpu_custom_call.1} parent=1 // pred_check_branch
      %65 = sbr.rel (0) target = $region29
    $region28: #{tpu_custom_call.1} parent=1 // pred_region
      _
    $region29: #{tpu_custom_call.1} parent=1 // pred_fallthru
      _
    // Predicated region
    $region30: #{tpu_custom_call.1} parent=1 // pred_check
      _
    $region31: #{tpu_custom_call.1} parent=1 // pred_check_branch
      %67 = sbr.rel (0) target = $region33
    $region32: #{tpu_custom_call.1} parent=1 // pred_region
      %68 = dma.done [#allocation3], 64
    $region33: #{tpu_custom_call.1} parent=1 // pred_fallthru
      _
    // Predicated region
    $region34: #{tpu_custom_call.1} parent=1 // pred_check
      _
    $region35: #{tpu_custom_call.1} parent=1 // pred_check_branch
      %70 = sbr.rel (0) target = $region37
    $region36: #{tpu_custom_call.1} parent=1 // pred_region
      %71 = dma.done [#allocation6], 64
    $region37: #{tpu_custom_call.1} parent=1 // pred_fallthru
      _
    // Predicated region
    $region38: #{tpu_custom_call.1} parent=1 // pred_check
      _
    $region39: #{tpu_custom_call.1} parent=1 // pred_check_branch
      %73 = sbr.rel (0) target = $region41
    $region40: #{tpu_custom_call.1} parent=1 // pred_region
      %74 = dma.done [#allocation6], 1024
    $region41: #{tpu_custom_call.1} parent=1 // pred_fallthru
      _
    // Predicated region
    $region42: #{tpu_custom_call.1} parent=1 // pred_check
      _
    $region43: #{tpu_custom_call.1} parent=1 // pred_check_branch
      %76 = sbr.rel (0) target = $region45
    $region44: #{tpu_custom_call.1} parent=1 // pred_region
      %77 = dma.done [#allocation9], 1024
    $region45: #{tpu_custom_call.1} parent=1 // pred_fallthru
      _
    %v79 = vld [vmem:[#allocation2] sm:$0xf]
    %v80 = vld [vmem:[#allocation5] sm:$0xf]
    %v81 = vld [vmem:[%s2] sm:$0x1]
    %v83 = vlaneseq
    %v84 = vshrl.u32 %v83, 7
    %v85 = vsub.s32 0, %v84
    %v86 = vrot.slane %v81, %v85
    %vm88 = vcmask 64512
    %v90 = vsel %vm88, %v79, 0
    %vm92 = vcmask 1043456
    %v94 = vsel %vm92, %v80, 0
    %96 = vmatprep.subr.bf16.mxu0 0
    %97 = vmatpush1.bf16.msra.mxu0 %v94
    %98 = vmatprep.subr.bf16.mxu0 0
    %99 = vmatpush1.bf16.msra.mxu0 0
    %100 = vmatprep.subr.bf16.mxu0 0
    %101 = vmatpush1.bf16.msra.mxu0 0
    %102 = vmatprep.subr.bf16.mxu0 0
    %103 = vmatpush1.bf16.msra.mxu0 0
    %104 = vmatprep.subr.bf16.mxu0 0
    %105 = vmatpush1.bf16.msra.mxu0 0
    %106 = vmatprep.subr.bf16.mxu0 0
    %107 = vmatpush1.bf16.msra.mxu0 0
    %108 = vmatprep.subr.bf16.mxu0 0
    %109 = vmatpush1.bf16.msra.mxu0 0
    %110 = vmatprep.subr.bf16.mxu0 0
    %111 = vmatpush1.bf16.msra.mxu0 0
    %112 = vmatprep.subr.bf16.mxu0 0
    %113 = vmatpush1.bf16.msra.mxu0 0
    %114 = vmatprep.subr.bf16.mxu0 0
    %115 = vmatpush1.bf16.msra.mxu0 0
    %116 = vmatprep.subr.bf16.mxu0 0
    %117 = vmatpush1.bf16.msra.mxu0 0
    %118 = vmatprep.subr.bf16.mxu0 0
    %119 = vmatpush1.bf16.msra.mxu0 0
    %120 = vmatprep.subr.bf16.mxu0 0
    %121 = vmatpush1.bf16.msra.mxu0 0
    %122 = vmatprep.subr.bf16.mxu0 0
    %123 = vmatpush1.bf16.msra.mxu0 0
    %124 = vmatprep.subr.bf16.mxu0 0
    %125 = vmatpush1.bf16.msra.mxu0 0
    %126 = vmatprep.subr.bf16.mxu0 0
    %127 = vmatpush1.bf16.msra.mxu0 0
    %128 = vmatprep.mubr.bf16.mxu0 0
    %129 = vmatmul.mubr.bf16.gmra.mrb[0].mxu0 %v90
    %v130 = vpop.f32.mrb[0].mxu0
    %v131 = vadd.f32 %v86, %v130
    %v132 = vpop.f32.mrb[0].mxu0
    %v133 = vpop.f32.mrb[0].mxu0
    %v134 = vpop.f32.mrb[0].mxu0
    %135 = vdwg.mxu0
    %v136 = vtanh.pop %v131
    %v137 = vpack.c.bf16 %v136, %v136
    %v138 = vld [vmem:[#allocation7] sm:$0xf]
    %v139 = vld [vmem:[#allocation7 + $0x4] sm:$0xf]
    %v140 = vld [vmem:[#allocation7 + $0x8] sm:$0xf]
    %v141 = vld [vmem:[#allocation7 + $0xc] sm:$0xf]
    %v142 = vld [vmem:[#allocation7 + $0x10] sm:$0xf]
    %v143 = vld [vmem:[#allocation7 + $0x14] sm:$0xf]
    %v144 = vld [vmem:[#allocation7 + $0x18] sm:$0xf]
    %v145 = vld [vmem:[#allocation7 + $0x1c] sm:$0xf]
    %v146 = vld [vmem:[#allocation7 + $0x20] sm:$0xf]
    %v147 = vld [vmem:[#allocation7 + $0x24] sm:$0xf]
    %v148 = vld [vmem:[#allocation7 + $0x28] sm:$0xf]
    %v149 = vld [vmem:[#allocation7 + $0x2c] sm:$0xf]
    %v150 = vld [vmem:[#allocation7 + $0x30] sm:$0xf]
    %v151 = vld [vmem:[#allocation7 + $0x34] sm:$0xf]
    %v152 = vld [vmem:[#allocation7 + $0x38] sm:$0xf]
    %v153 = vld [vmem:[#allocation7 + $0x3c] sm:$0xf]
    %v154 = vld [vmem:[%s4] sm:$0x1]
    %v156 = vlaneseq
    %v157 = vshrl.u32 %v156, 7
    %v158 = vsub.s32 0, %v157
    %v159 = vrot.slane %v154, %v158
    %v177 = vunpack.c.l.b16 %v138
    %v178 = vunpack.c.l.b16 %v139
    %v179 = vunpack.c.l.b16 %v140
    %v180 = vunpack.c.l.b16 %v141
    %v181 = vunpack.c.l.b16 %v142
    %v182 = vunpack.c.l.b16 %v143
    %v183 = vunpack.c.l.b16 %v144
    %v184 = vunpack.c.l.b16 %v145
    %v185 = vunpack.c.l.b16 %v146
    %v186 = vunpack.c.l.b16 %v147
    %v187 = vunpack.c.l.b16 %v148
    %v188 = vunpack.c.l.b16 %v149
    %v189 = vunpack.c.l.b16 %v150
    %v190 = vunpack.c.l.b16 %v151
    %v191 = vunpack.c.l.b16 %v152
    %v192 = vunpack.c.l.b16 %v153
    %v193 = vpack.c.b16 %v178, %v177
    %v194 = vpack.c.b16 %v180, %v179
    %v195 = vpack.c.b16 %v182, %v181
    %v196 = vpack.c.b16 %v184, %v183
    %v197 = vpack.c.b16 %v186, %v185
    %v198 = vpack.c.b16 %v188, %v187
    %v199 = vpack.c.b16 %v190, %v189
    %v200 = vpack.c.b16 %v192, %v191
    %209 = vmatprep.subr.bf16.mxu0 0
    %210 = vmatpush1.bf16.msra.mxu0 %v193
    %211 = vmatprep.subr.bf16.mxu0 0
    %212 = vmatpush1.bf16.msra.mxu0 %v194
    %213 = vmatprep.subr.bf16.mxu0 0
    %214 = vmatpush1.bf16.msra.mxu0 %v195
    %215 = vmatprep.subr.bf16.mxu0 0
    %216 = vmatpush1.bf16.msra.mxu0 %v196
    %217 = vmatprep.subr.bf16.mxu0 0
    %218 = vmatpush1.bf16.msra.mxu0 %v197
    %219 = vmatprep.subr.bf16.mxu0 0
    %220 = vmatpush1.bf16.msra.mxu0 %v198
    %221 = vmatprep.subr.bf16.mxu0 0
    %222 = vmatpush1.bf16.msra.mxu0 %v199
    %223 = vmatprep.subr.bf16.mxu0 0
    %224 = vmatpush1.bf16.msra.mxu0 %v200
    %225 = vmatprep.subr.bf16.mxu0 0
    %226 = vmatpush1.bf16.msra.mxu0 0
    %227 = vmatprep.subr.bf16.mxu0 0
    %228 = vmatpush1.bf16.msra.mxu0 0
    %229 = vmatprep.subr.bf16.mxu0 0
    %230 = vmatpush1.bf16.msra.mxu0 0
    %231 = vmatprep.subr.bf16.mxu0 0
    %232 = vmatpush1.bf16.msra.mxu0 0
    %233 = vmatprep.subr.bf16.mxu0 0
    %234 = vmatpush1.bf16.msra.mxu0 0
    %235 = vmatprep.subr.bf16.mxu0 0
    %236 = vmatpush1.bf16.msra.mxu0 0
    %237 = vmatprep.subr.bf16.mxu0 0
    %238 = vmatpush1.bf16.msra.mxu0 0
    %239 = vmatprep.subr.bf16.mxu0 0
    %240 = vmatpush1.bf16.msra.mxu0 0
    %241 = vmatprep.mubr.bf16.mxu0 0
    %242 = vmatmul.mubr.bf16.gmra.mrb[0].mxu0 %v137
    %v243 = vpop.f32.mrb[0].mxu0
    %v244 = vadd.f32 %v159, %v243
    %v245 = vpop.f32.mrb[0].mxu0
    %v246 = vpop.f32.mrb[0].mxu0
    %v247 = vpop.f32.mrb[0].mxu0
    %248 = vdwg.mxu0
    %v249 = vtanh.pop %v244
    %v250 = vpack.c.bf16 %v249, %v249
    %v251 = vld [vmem:[#allocation8] sm:$0xf]
    %v252 = vld [vmem:[#allocation8 + $0x4] sm:$0xf]
    %v253 = vld [vmem:[#allocation8 + $0x8] sm:$0xf]
    %v254 = vld [vmem:[#allocation8 + $0xc] sm:$0xf]
    %v255 = vld [vmem:[#allocation8 + $0x10] sm:$0xf]
    %v256 = vld [vmem:[#allocation8 + $0x14] sm:$0xf]
    %v257 = vld [vmem:[#allocation8 + $0x18] sm:$0xf]
    %v258 = vld [vmem:[#allocation8 + $0x1c] sm:$0xf]
    %v259 = vld [vmem:[#allocation8 + $0x20] sm:$0xf]
    %v260 = vld [vmem:[#allocation8 + $0x24] sm:$0xf]
    %v261 = vld [vmem:[#allocation8 + $0x28] sm:$0xf]
    %v262 = vld [vmem:[#allocation8 + $0x2c] sm:$0xf]
    %v263 = vld [vmem:[#allocation8 + $0x30] sm:$0xf]
    %v264 = vld [vmem:[#allocation8 + $0x34] sm:$0xf]
    %v265 = vld [vmem:[#allocation8 + $0x38] sm:$0xf]
    %v266 = vld [vmem:[#allocation8 + $0x3c] sm:$0xf]
    %v267 = vld [vmem:[%s6] sm:$0x1]
    %v269 = vlaneseq
    %v270 = vshrl.u32 %v269, 7
    %v271 = vsub.s32 0, %v270
    %v272 = vrot.slane %v267, %v271
    %v290 = vunpack.c.l.b16 %v251
    %v291 = vunpack.c.l.b16 %v252
    %v292 = vunpack.c.l.b16 %v253
    %v293 = vunpack.c.l.b16 %v254
    %v294 = vunpack.c.l.b16 %v255
    %v295 = vunpack.c.l.b16 %v256
    %v296 = vunpack.c.l.b16 %v257
    %v297 = vunpack.c.l.b16 %v258
    %v298 = vunpack.c.l.b16 %v259
    %v299 = vunpack.c.l.b16 %v260
    %v300 = vunpack.c.l.b16 %v261
    %v301 = vunpack.c.l.b16 %v262
    %v302 = vunpack.c.l.b16 %v263
    %v303 = vunpack.c.l.b16 %v264
    %v304 = vunpack.c.l.b16 %v265
    %v305 = vunpack.c.l.b16 %v266
    %v306 = vpack.c.b16 %v291, %v290
    %v307 = vpack.c.b16 %v293, %v292
    %v308 = vpack.c.b16 %v295, %v294
    %v309 = vpack.c.b16 %v297, %v296
    %v310 = vpack.c.b16 %v299, %v298
    %v311 = vpack.c.b16 %v301, %v300
    %v312 = vpack.c.b16 %v303, %v302
    %v313 = vpack.c.b16 %v305, %v304
    %322 = vmatprep.subr.bf16.mxu0 0
    %323 = vmatpush1.bf16.msra.mxu0 %v306
    %324 = vmatprep.subr.bf16.mxu0 0
    %325 = vmatpush1.bf16.msra.mxu0 %v307
    %326 = vmatprep.subr.bf16.mxu0 0
    %327 = vmatpush1.bf16.msra.mxu0 %v308
    %328 = vmatprep.subr.bf16.mxu0 0
    %329 = vmatpush1.bf16.msra.mxu0 %v309
    %330 = vmatprep.subr.bf16.mxu0 0
    %331 = vmatpush1.bf16.msra.mxu0 %v310
    %332 = vmatprep.subr.bf16.mxu0 0
    %333 = vmatpush1.bf16.msra.mxu0 %v311
    %334 = vmatprep.subr.bf16.mxu0 0
    %335 = vmatpush1.bf16.msra.mxu0 %v312
    %336 = vmatprep.subr.bf16.mxu0 0
    %337 = vmatpush1.bf16.msra.mxu0 %v313
    %338 = vmatprep.subr.bf16.mxu0 0
    %339 = vmatpush1.bf16.msra.mxu0 0
    %340 = vmatprep.subr.bf16.mxu0 0
    %341 = vmatpush1.bf16.msra.mxu0 0
    %342 = vmatprep.subr.bf16.mxu0 0
    %343 = vmatpush1.bf16.msra.mxu0 0
    %344 = vmatprep.subr.bf16.mxu0 0
    %345 = vmatpush1.bf16.msra.mxu0 0
    %346 = vmatprep.subr.bf16.mxu0 0
    %347 = vmatpush1.bf16.msra.mxu0 0
    %348 = vmatprep.subr.bf16.mxu0 0
    %349 = vmatpush1.bf16.msra.mxu0 0
    %350 = vmatprep.subr.bf16.mxu0 0
    %351 = vmatpush1.bf16.msra.mxu0 0
    %352 = vmatprep.subr.bf16.mxu0 0
    %353 = vmatpush1.bf16.msra.mxu0 0
    %354 = vmatprep.mubr.bf16.mxu0 0
    %355 = vmatmul.mubr.bf16.gmra.mrb[0].mxu0 %v250
    %v356 = vpop.f32.mrb[0].mxu0
    %v357 = vadd.f32 %v272, %v356
    %v358 = vpop.f32.mrb[0].mxu0
    %v359 = vpop.f32.mrb[0].mxu0
    %v360 = vpop.f32.mrb[0].mxu0
    %361 = vdwg.mxu0
    %362 = vst [vmem:[#allocation10] sm:$0xff] %v357
    // Predicated region
    $region46: #{tpu_custom_call.1} parent=1 // pred_check
      _
    $region47: #{tpu_custom_call.1} parent=1 // pred_check_branch
      %364 = sbr.rel (0) target = $region49
    $region48: #{tpu_custom_call.1} parent=1 // pred_region
      %s366 = ssub.s32 128, 128
      %367 = vsyncadd [#allocation4], %s366
      %s369 = sshll.u32 [#allocation10], 4
      %s370 = int_to_ptr.vmem [resolvable:$true] %s369
      %372 = dma.vmem_to_hbm [thread:$0]  %s370, 128, %s7, [#allocation4]
    $region49: #{tpu_custom_call.1} parent=1 // pred_fallthru
      _
    // Predicated region
    $region50: #{tpu_custom_call.1} parent=1 // pred_check
      _
    $region51: #{tpu_custom_call.1} parent=1 // pred_check_branch
      %374 = sbr.rel (0) target = $region53
    $region52: #{tpu_custom_call.1} parent=1 // pred_region
      %375 = dma.done [#allocation4], 128
    $region53: #{tpu_custom_call.1} parent=1 // pred_fallthru
      _
    %376 = vsyncpa [#allocation3], 1
    %377 = vsyncpa [#allocation6], 1
    %378 = vsyncpa [#allocation9], 1
    %379 = vsyncpa [#allocation4], 1

</llo_original>
